<compile_context>
chip_gen: v6e
topology: v6e:2x2x1
jax: 0.10.0
libtpu: 0.0.40
codegen_flags: <defaults>
</compile_context>

<pallas_src>
import jax
import jax.numpy as jnp
from jax.experimental import pallas as pl
from jax.experimental.pallas import tpu as pltpu

HIDDEN = 256   # in_features of nn.Linear(256, 1)
OUT = 1        # out_features
TM_MAX = 4096  # batch tile (rows); sweep 2048-8192 per generation (see header)


def _round_up(x, m):
    return ((x + m - 1) // m) * m


def _linear_kernel(x_ref, w_ref, b_ref, o_ref):
    # x_ref: (TM, 256) VMEM   w_ref: (1, 256) VMEM (resident across the grid)
    # b_ref: (1,) SMEM scalar o_ref: (TM, 1) VMEM
    x = x_ref[...].astype(jnp.float32)           # (TM, 256)
    w = w_ref[...].astype(jnp.float32)           # (1, 256), sublane-replicated
    # VPU multiply + XLU lane reduction (avoids a wasteful N=1 MXU matmul).
    acc = jnp.sum(x * w, axis=-1, keepdims=True)  # (TM, 1) f32
    o_ref[...] = (acc + b_ref[0]).astype(o_ref.dtype)


def acs_critic_last_layer(logits, weight, bias, *, tm_max=TM_MAX):
    """Pallas implementation of ACSCriticLastLayer.forward.

    Args:
      logits: (B, 256) float32 (or bf16; up-cast in-kernel)
      weight: (1, 256) float32  (PyTorch nn.Linear weight layout, used as-is)
      bias:   (1,) float32
    Returns:
      q1: (B, 1), dtype of `logits`
    """
    B, H = logits.shape
    assert H == HIDDEN
    assert weight.shape == (OUT, HIDDEN)
    assert bias.shape == (OUT,)

    # Batch tile: multiple of 8 (sublane), capped at tm_max.  No input padding:
    # the grid uses cdiv and the partial edge block is handled by Pallas'
    # masked reads (garbage rows) / masked writes (dropped rows).
    tm = min(tm_max, _round_up(B, 8))
    grid = (pl.cdiv(B, tm),)

    out = pl.pallas_call(
        _linear_kernel,
        out_shape=jax.ShapeDtypeStruct((B, OUT), logits.dtype),
        grid=grid,
        in_specs=[
            pl.BlockSpec((tm, HIDDEN), lambda i: (i, 0)),          # batch tile
            pl.BlockSpec((OUT, HIDDEN), lambda i: (0, 0)),         # weight, resident
            pl.BlockSpec(memory_space=pltpu.MemorySpace.SMEM),     # bias scalar
        ],
        out_specs=pl.BlockSpec((tm, OUT), lambda i: (i, 0)),
        compiler_params=pltpu.CompilerParams(
            dimension_semantics=("parallel",),      # hint only (see header TODO)
            vmem_limit_bytes=32 * 1024 * 1024,      # headroom for TM=4096 tiles
        ),
    )(logits, weight, bias)

    return out


if __name__ == "__main__":
    key = jax.random.PRNGKey(0)
    k_x, k_w, k_b, k_x2 = jax.random.split(key, 4)

    # Deterministic parameter init matching nn.Linear default:
    # U(-1/sqrt(in_features), 1/sqrt(in_features))
    bound = 1.0 / jnp.sqrt(jnp.float32(HIDDEN))
    weight = jax.random.uniform(k_w, (OUT, HIDDEN), jnp.float32, -bound, bound)
    bias = jax.random.uniform(k_b, (OUT,), jnp.float32, -bound, bound)

    # Small batch (single tile, grid=(1,))
    B = 8
    logits = jax.random.normal(k_x, (B, HIDDEN), dtype=jnp.float32)
    q1 = jax.block_until_ready(acs_critic_last_layer(logits, weight, bias))
    ref = logits @ weight.T + bias
    assert q1.shape == (B, OUT)
    assert jnp.allclose(q1, ref, atol=1e-5, rtol=1e-5)

    # Non-multiple batch with a small forced tile: exercises a multi-step grid
    # plus partial edge-block masking on both the input and the output.
    B2 = 37
    logits2 = jax.random.normal(k_x2, (B2, HIDDEN), dtype=jnp.float32)
    q2 = jax.block_until_ready(
        acs_critic_last_layer(logits2, weight, bias, tm_max=16))
    ref2 = logits2 @ weight.T + bias
    assert q2.shape == (B2, OUT)
    assert jnp.allclose(q2, ref2, atol=1e-5, rtol=1e-5)

    print("KERNEL_OK")
</pallas_src>

<mosaic_0001>
module attributes {stable_mosaic.version = 11 : i64} {
  func.func @_linear_kernel(%arg0: i32, %arg1: memref<8x256xf32, #tpu.memory_space<vmem>>, %arg2: memref<1x256xf32, #tpu.memory_space<vmem>>, %arg3: memref<1xf32, #tpu.memory_space<smem>>, %arg4: memref<8x1xf32, #tpu.memory_space<vmem>>) attributes {dimension_semantics = [#tpu.dimension_semantics<parallel>], iteration_bounds = array<i64: 1>, scalar_prefetch = 0 : i64, scratch_operands = 0 : i64, tpu.core_type = #tpu.core_type<tc>, window_params = [{transform_indices = @transform_0, window_bounds = array<i64: 8, 256>}, {pipeline_mode = #tpu.pipeline_mode<synchronous>, transform_indices = @transform_1, window_bounds = array<i64: 1, 256>}, {transform_indices = @transform_2, window_bounds = array<i64: 1>}, {transform_indices = @transform_3, window_bounds = array<i64: 8, 1>}]} {
    %c0 = arith.constant 0 : index
    %c0_0 = arith.constant 0 : index
    %0 = vector.load %arg1[%c0, %c0_0] : memref<8x256xf32, #tpu.memory_space<vmem>>, vector<8x256xf32>
    %c0_1 = arith.constant 0 : index
    %c0_2 = arith.constant 0 : index
    %1 = vector.load %arg2[%c0_1, %c0_2] : memref<1x256xf32, #tpu.memory_space<vmem>>, vector<1x256xf32>
    %2 = vector.broadcast %1 : vector<1x256xf32> to vector<8x256xf32>
    %3 = arith.mulf %0, %2 : vector<8x256xf32>
    %cst = arith.constant dense<0.000000e+00> : vector<8xf32>
    %4 = vector.multi_reduction <add>, %3, %cst [1] : vector<8x256xf32> to vector<8xf32>
    %5 = vector.shape_cast %4 : vector<8xf32> to vector<8x1xf32>
    %c0_3 = arith.constant 0 : index
    %6 = memref.load %arg3[%c0_3] : memref<1xf32, #tpu.memory_space<smem>>
    %7 = vector.broadcast %6 : f32 to vector<8x1xf32>
    %8 = arith.addf %5, %7 : vector<8x1xf32>
    %c0_4 = arith.constant 0 : index
    %c0_5 = arith.constant 0 : index
    %9 = vector.load %arg4[%c0_4, %c0_5] : memref<8x1xf32, #tpu.memory_space<vmem>>, vector<8x1xf32>
    tpu.vector_store %arg4[%c0_4, %c0_5], %8 {strides = array<i32>} : memref<8x1xf32, #tpu.memory_space<vmem>>, vector<8x1xf32>,
    return
  }
  func.func @transform_0(%arg0: i32) -> (i32, i32) {
    %c0_i32 = arith.constant 0 : i32
    %c0_i32_0 = arith.constant 0 : i32
    return %arg0, %c0_i32 : i32, i32
  }
  func.func @transform_1(%arg0: i32) -> (i32, i32) {
    %c0_i32 = arith.constant 0 : i32
    %c0_i32_0 = arith.constant 0 : i32
    %c0_i32_1 = arith.constant 0 : i32
    return %c0_i32, %c0_i32_0 : i32, i32
  }
  func.func @transform_2(%arg0: i32) -> i32 {
    %c0_i32 = arith.constant 0 : i32
    %c0_i32_0 = arith.constant 0 : i32
    return %c0_i32 : i32
  }
  func.func @transform_3(%arg0: i32) -> (i32, i32) {
    %c0_i32 = arith.constant 0 : i32
    %c0_i32_0 = arith.constant 0 : i32
    return %arg0, %c0_i32 : i32, i32
  }
}

</mosaic_0001>

<llo_original>
// kernel: tpu_custom_call.1
$region0: #{tpu_custom_call.1}
  #allocation0 [shape = 'u32[]', space=smem, size = 0x4, offset = 0x4, fixed_abs, tag = 'smem constant byte address 0x4 - core index']
  #allocation1 [shape = 'u32[144,128]{1,0:T(1,128)}', space=vmem, size = 0x12000, scoped, tag = 'internal scratch']
  #allocation2 [shape = 'f32[1]{0:T(128)S(6)}', space=smem, size = 0x200, scoped, tag = 'scoped memory for tpu_custom_call.1']
  %s0 = inlined_call_operand.hbm [shape: f32[8,256], index: 0, kind: input, shape index: {}]
  %s1 = inlined_call_operand.vmem [shape: f32[1,256], index: 1, kind: input, shape index: {}]
  %s2 = inlined_call_operand.<no memory space> [shape: f32[1], index: 2, kind: input, shape index: {}]
  %s3 = inlined_call_operand.vmem [shape: f32[8,1], index: 3, kind: output, shape index: {}]
  %s4 = sld [smem:[#allocation0]]
  $region26: #{tpu_custom_call.1} parent=0
    _
  %s6 = ssub.s32 1, %s4
  %s7 = scalar_select 0, %s6, %s4
  %8 = sst [smem:[#allocation2]] %s2
  $region1: #{tpu_custom_call.1} parent=0
    #allocation3 [shape = 'u8[8192]{0}', space=vmem, size = 0x2000, scoped, tag = 'input window, operand 0, single buffered']
    #allocation4 [shape = 's32[1]{0}', space=sflag, size = 0x4, scoped, tag = 'scoped memory for tpu_custom_call.1']
    %9 = vsyncpa [#allocation4], 0
    // Predicated region
    $region2: #{tpu_custom_call.1} parent=1 // pred_check
      _
    $region3: #{tpu_custom_call.1} parent=1 // pred_check_branch
      %11 = sbr.rel (0) target = $region5
    $region4: #{tpu_custom_call.1} parent=1 // pred_region
      %s13 = ssub.s32 256, 256
      %14 = vsyncadd [#allocation4], %s13
      %s16 = sshll.u32 [#allocation3], 4
      %s17 = int_to_ptr.vmem [resolvable:$true] %s16
      %19 = dma.hbm_to_vmem [thread:$0]  %s0, 256, %s17, [#allocation4]
    $region5: #{tpu_custom_call.1} parent=1 // pred_fallthru
      _
    // Predicated region
    $region6: #{tpu_custom_call.1} parent=1 // pred_check
      _
    $region7: #{tpu_custom_call.1} parent=1 // pred_check_branch
      %21 = sbr.rel (0) target = $region9
    $region8: #{tpu_custom_call.1} parent=1 // pred_region
      _
    $region9: #{tpu_custom_call.1} parent=1 // pred_fallthru
      _
    // Predicated region
    $region10: #{tpu_custom_call.1} parent=1 // pred_check
      _
    $region11: #{tpu_custom_call.1} parent=1 // pred_check_branch
      %23 = sbr.rel (0) target = $region13
    $region12: #{tpu_custom_call.1} parent=1 // pred_region
      _
    $region13: #{tpu_custom_call.1} parent=1 // pred_fallthru
      _
    // Predicated region
    $region14: #{tpu_custom_call.1} parent=1 // pred_check
      _
    $region15: #{tpu_custom_call.1} parent=1 // pred_check_branch
      %25 = sbr.rel (0) target = $region17
    $region16: #{tpu_custom_call.1} parent=1 // pred_region
      %26 = dma.done [#allocation4], 256
    $region17: #{tpu_custom_call.1} parent=1 // pred_fallthru
      _
    %v27 = vld [vmem:[#allocation3] sm:$0xff]
    %v28 = vld [vmem:[#allocation3 + $0x8] sm:$0xff]
    %v29 = vld [vmem:[%s1] sm:$0x3]
    %v31 = vlaneseq
    %v32 = vshrl.u32 %v31, 7
    %v33 = vsub.s32 0, %v32
    %v34 = vrot.slane %v29, %v33
    %v35 = vlaneseq
    %v36 = vshrl.u32 %v35, 7
    %v37 = vsub.s32 1, %v36
    %v38 = vrot.slane %v29, %v37
    %v41 = vmul.f32 %v27, %v34
    %v42 = vmul.f32 %v28, %v38
    %v43 = vadd.f32 %v41, %v42
    %44 = vadd.xlane.f32.xlu0 %v43
    %v45 = vpop.xlane.xlu0 %44
    %s46 = sld [smem:[#allocation2]]
    %v47 = vstv %s46
    %v48 = vadd.f32 %v45, %v47
    %vm49 = vcmask 7168
    %50 = vst.msk [vmem:[%s3] sm:$0xff] %vm49, %v48
    // Predicated region
    $region18: #{tpu_custom_call.1} parent=1 // pred_check
      _
    $region19: #{tpu_custom_call.1} parent=1 // pred_check_branch
      %52 = sbr.rel (0) target = $region21
    $region20: #{tpu_custom_call.1} parent=1 // pred_region
      _
    $region21: #{tpu_custom_call.1} parent=1 // pred_fallthru
      _
    // Predicated region
    $region22: #{tpu_custom_call.1} parent=1 // pred_check
      _
    $region23: #{tpu_custom_call.1} parent=1 // pred_check_branch
      %54 = sbr.rel (0) target = $region25
    $region24: #{tpu_custom_call.1} parent=1 // pred_region
      _
    $region25: #{tpu_custom_call.1} parent=1 // pred_fallthru
      _
    %55 = vsyncpa [#allocation4], 1

</llo_original>
